<compile_context>
chip_gen: v7x
topology: tpu7x:2x2x1
jax: 0.10.0
libtpu: 0.0.40
codegen_flags: <defaults>
</compile_context>

<pallas_src>
import functools

import jax
import jax.numpy as jnp
from jax.experimental import pallas as pl
from jax.experimental.pallas import tpu as pltpu

# ----------------------------- cfg constants --------------------------------
NUM_LANDMARKS = 121
NUM_FACE_LANDMARKS = 70      # landmark indices 9..78
NUM_BODY_LANDMARKS = 51      # torso 0..8 + hands 79..120
HIER_LEVELS = 2
LAMBDA_REG = 1.0
LAMBDA_CLIP_KL = 1.0
CLIP_CODE_DIM = 8
NUM_TRAIN_SAMPLES = 16
EPS = 1e-8                   # torch.cosine_similarity eps (clamped per-norm)
LANE_W = 128                 # padded landmark lane width (one vreg lane width)

VMEM_SPEC = pl.BlockSpec(memory_space=pltpu.MemorySpace.VMEM)
SMEM_SPEC = pl.BlockSpec(memory_space=pltpu.MemorySpace.SMEM)

# slot order inside the SMEM f32[11] scalar-loss output
(L_FACE_BODY, L_SIM, L_RECON, L_GREG, L_FACE_REG, L_BODY_REG, L_HUBER,
 L_FOREARM, L_ARM, L_KL, L_GLOSS) = range(11)
NUM_LOSS_SLOTS = 11


# ------------------------- fused kernel --------------------------------------
def _joint2pose_kernel(gt_ref, face_ref, body_ref, pbody_ref, bfeat_ref, pbfeat_ref,
                       cc_ref, fb_ref, pred_ref, recon_ref, loss_ref, *, B, T, C):
    # Row layout (coordinate-major): rows [0, N) are the x-coordinate of the N = B*T frames,
    # rows [N, 2N) are the y-coordinate.  Lane layout: landmark index, zero-padded to LANE_W.
    N = B * T

    gt = gt_ref[...]          # [R, 128]  poses_gt          (121 real lanes)
    face = face_ref[...]      # [R, 128]  face_pred         (70 real lanes)
    body = body_ref[...]      # [R, 128]  body_pred         (51 real lanes)
    pbody = pbody_ref[...]    # [R, 128]  pose_body_pred    (51 real lanes)

    R, W = gt.shape

    lane = jax.lax.broadcasted_iota(jnp.int32, (1, W), 1)
    is_torso_out = lane < 9                                   # output lanes 0..8
    is_face_out = (lane >= 9) & (lane < 79)                   # output lanes 9..78
    is_hand_out = (lane >= 79) & (lane < NUM_LANDMARKS)       # output lanes 79..120
    is_face_in = lane < NUM_FACE_LANDMARKS                    # face-layout lanes 0..69
    is_hand_in = (lane >= 9) & (lane < NUM_BODY_LANDMARKS)    # body-layout lanes 9..50

    zero = jnp.zeros_like(gt)
    root = body[:, 0:1]                                       # body_pred[..., :2, 0, None]
    gt_root = gt[:, 0:1]

    # pltpu.roll(x, k): result lane l holds x[(l - k) mod W] (np.roll semantics).
    face_sh9 = pltpu.roll(face, shift=9, axis=1)              # lane l <- face[l - 9]
    body_sh70 = pltpu.roll(body, shift=70, axis=1)            # lane l <- body[l - 70]
    pbody_sh70 = pltpu.roll(pbody, shift=70, axis=1)          # lane l <- pbody[l - 70]
    gt_shm9 = pltpu.roll(gt, shift=W - 9, axis=1)             # lane l <- gt[l + 9]
    gt_shm70 = pltpu.roll(gt, shift=W - 70, axis=1)           # lane l <- gt[l + 70]

    # poses_pred_batch = cat([body[:9], face + root, body[9:51]]); padded lanes stay zero.
    poses_pred = jnp.where(is_torso_out, body, zero)
    poses_pred = jnp.where(is_face_out, face_sh9 + root, poses_pred)
    poses_pred = jnp.where(is_hand_out, body_sh70, poses_pred)
    pred_ref[...] = poses_pred

    # poses_recon_batch = cat([pose_body_pred[:9], gt_face, pose_body_pred[9:51]])
    recon = jnp.where(is_torso_out, pbody, zero)
    recon = jnp.where(is_face_out, gt, recon)
    recon = jnp.where(is_hand_out, pbody_sh70, recon)
    recon_ref[...] = recon

    # ground-truth face / body parts in the face-/body-local lane layouts (padded lanes zero)
    face_gt = jnp.where(is_face_in, gt_shm9 - gt_root, zero)
    body_gt = jnp.where(is_torso_out, gt, zero)
    body_gt = jnp.where(is_hand_in, gt_shm70, body_gt)

    # ---- nn.SmoothL1Loss(reduction='sum') (beta=1) and L1 element maps ----
    def smooth_l1_map(a, b):
        d = jnp.abs(a - b)
        return jnp.where(d < 1.0, 0.5 * d * d, d - 0.5)

    # Cross-sublane (VPU-only) partial sums first; the expensive cross-lane pass is then a single
    # one-vreg reduction per scalar (instead of four multi-vreg full reductions).
    def slab_sum(m):
        return jnp.sum(jnp.sum(m, axis=0, keepdims=True))

    recon_sum = slab_sum(smooth_l1_map(pbody, body_gt))
    face_sum = slab_sum(smooth_l1_map(face, face_gt))
    body_sum = slab_sum(smooth_l1_map(body, body_gt))
    reg_sum = slab_sum(jnp.abs(poses_pred - gt))              # L1 'none' summed (CHANGEWEIGHT=None)

    # ---- feature cosine-similarity loss (torch.cosine_similarity: per-norm eps clamp) ----
    bf = bfeat_ref[...]       # [N, F]
    pbf = pbfeat_ref[...]     # [N, F]
    w12 = jnp.sum(bf * pbf, axis=-1, keepdims=True)
    w11 = jnp.sum(bf * bf, axis=-1, keepdims=True)
    w22 = jnp.sum(pbf * pbf, axis=-1, keepdims=True)
    cos_feat = (w12 * jax.lax.rsqrt(jnp.maximum(w11, EPS * EPS))
                    * jax.lax.rsqrt(jnp.maximum(w22, EPS * EPS)))
    sim_loss = jnp.mean(1.0 - cos_feat)

    # ---- fused forearm / arm direction cosine^100 means ----
    # Every segment is (landmark j, landmark j-1): diff[l] = x[l] - x[l-1] puts
    # right-arm at lane 2, right-forearm at lane 3, left-arm at lane 5, left-forearm at lane 6.
    px, py = poses_pred[:N], poses_pred[N:]                   # x / y coordinate rows
    gx, gy = gt[:N], gt[N:]
    dpx = px - pltpu.roll(px, shift=1, axis=1)
    dpy = py - pltpu.roll(py, shift=1, axis=1)
    dgx = gx - pltpu.roll(gx, shift=1, axis=1)
    dgy = gy - pltpu.roll(gy, shift=1, axis=1)
    d12 = dpx * dgx + dpy * dgy
    d11 = dpx * dpx + dpy * dpy
    d22 = dgx * dgx + dgy * dgy
    cos = (d12 * jax.lax.rsqrt(jnp.maximum(d11, EPS * EPS))
               * jax.lax.rsqrt(jnp.maximum(d22, EPS * EPS)))
    # cos^100 = cos^64 * cos^32 * cos^4 (binary exponentiation), one chain for all lanes
    c2 = cos * cos
    c4 = c2 * c2
    c8 = c4 * c4
    c16 = c8 * c8
    c32 = c16 * c16
    c64 = c32 * c32
    pc = c64 * c32 * c4
    pc_col = jnp.sum(pc, axis=0, keepdims=True)               # [1, W] cross-sublane partial sums

    inv_n = 1.0 / float(N)

    def lane_mean(k):                                         # mean over the N frames at lane k
        return jnp.sum(jnp.where(lane == k, pc_col, 0.0)) * inv_n

    m_ra = lane_mean(2)       # right arm      (2 - 1)
    m_rf = lane_mean(3)       # right forearm  (3 - 2)
    m_la = lane_mean(5)       # left arm       (5 - 4)
    m_lf = lane_mean(6)       # left forearm   (6 - 5)

    # ---- clip-code KL (FRAME_VARIANT=False); torch.var default unbiased (ddof=1) ----
    cc = cc_ref[...]                                          # [B, CLIP_CODE_DIM]
    mu = jnp.mean(cc, axis=0, keepdims=True)
    var = jnp.sum((cc - mu) * (cc - mu), axis=0, keepdims=True) / float(max(B - 1, 1))
    safe_var = jnp.where(var > 0.0, var, 1.0)                 # NaN-safe before masking
    kl_raw = 0.5 * jnp.mean(-jnp.log(safe_var) + mu * mu + var - 1.0) * LAMBDA_CLIP_KL
    # original: python `if (var != 0).all()`; here the KL contribution is masked instead.
    nz_flag = jnp.min(jnp.where(var > 0.0, 1.0, 0.0))
    kl = kl_raw * nz_flag

    # ---- final (constant-weighted) loss assembly, all in-kernel ----
    fb = fb_ref[0]                                            # face_body_correlation_loss * 1
    denom_body = float(B * T * HIER_LEVELS * NUM_BODY_LANDMARKS)
    denom_face = float(B * T * HIER_LEVELS * NUM_FACE_LANDMARKS)
    denom_all = float(B * T * HIER_LEVELS * NUM_LANDMARKS)
    denom_reg = float(B * T * C * NUM_LANDMARKS)

    recon_loss = recon_sum * (20.0 / denom_body)
    g_reg_loss = reg_sum * (LAMBDA_REG / denom_reg)           # L1 'none' -> mean
    face_reg = face_sum * 20.0
    body_reg = body_sum * 20.0
    face_reg_loss = face_reg / denom_face
    body_reg_loss = body_reg / denom_body
    huber_loss = (face_reg + body_reg) / denom_all
    forearm_loss = (1.0 - m_lf) + (1.0 - m_rf)
    arm_loss = (1.0 - m_la) + (1.0 - m_ra)
    pred_loss = g_reg_loss + huber_loss + forearm_loss + arm_loss
    g_loss = pred_loss + sim_loss + recon_loss + fb + kl

    loss_ref[L_FACE_BODY] = fb
    loss_ref[L_SIM] = sim_loss
    loss_ref[L_RECON] = recon_loss
    loss_ref[L_GREG] = g_reg_loss
    loss_ref[L_FACE_REG] = face_reg_loss
    loss_ref[L_BODY_REG] = body_reg_loss
    loss_ref[L_HUBER] = huber_loss
    loss_ref[L_FOREARM] = forearm_loss
    loss_ref[L_ARM] = arm_loss
    loss_ref[L_KL] = kl
    loss_ref[L_GLOSS] = g_loss


def _fused_pose_losses(gt2d, face2d, body2d, pbody2d, bfeat2d, pbfeat2d,
                       condition_code, fb1, *, B, T, C):
    R, W = gt2d.shape
    N, F = bfeat2d.shape
    f32 = jnp.float32
    out_shape = (
        jax.ShapeDtypeStruct((R, W), f32),                    # poses_pred (flat, padded)
        jax.ShapeDtypeStruct((R, W), f32),                    # poses_recon (flat, padded)
        jax.ShapeDtypeStruct((NUM_LOSS_SLOTS,), f32),         # scalar losses (SMEM)
    )
    bytes_accessed = 4 * (6 * R * W + 2 * N * F + B * CLIP_CODE_DIM + NUM_LOSS_SLOTS + 1)
    cost = pl.CostEstimate(flops=90 * R * W + 8 * N * F,
                           transcendentals=2 * N * W + 2 * N + 2 * CLIP_CODE_DIM,
                           bytes_accessed=bytes_accessed)
    kernel = functools.partial(_joint2pose_kernel, B=B, T=T, C=C)
    return pl.pallas_call(
        kernel,
        out_shape=out_shape,
        in_specs=[VMEM_SPEC] * 7 + [SMEM_SPEC],
        out_specs=(VMEM_SPEC, VMEM_SPEC, SMEM_SPEC),
        cost_estimate=cost,
    )(gt2d, face2d, body2d, pbody2d, bfeat2d, pbfeat2d, condition_code, fb1)


# ------------------------------- forward ------------------------------------
def joint2pose_forward(clips_code, clip_indices, poses_gt,
                       face_pred, body_pred, pose_body_pred,
                       body_feat, pose_body_feat, face_body_loss):
    B, T, C, L = poses_gt.shape
    N = B * T
    R = C * N
    f32 = jnp.float32

    # training path: condition_code = clips_code[clip_indices]
    condition_code = clips_code[clip_indices]                 # [B, CLIP_CODE_DIM]

    # coordinate-major flatten + zero-pad the landmark axis to one full lane width (128).
    # pad immediately after the transpose so it fuses into the same copy; the trailing reshape
    # only merges major dims and is free.
    def to_rows(x, last):                                     # [B,T,C,last] -> [R, 128]
        x = jnp.transpose(x.astype(f32), (2, 0, 1, 3))        # [C,B,T,last]
        x = jnp.pad(x, ((0, 0), (0, 0), (0, 0), (0, LANE_W - last)))
        return x.reshape(R, LANE_W)

    gt2d = to_rows(poses_gt, L)
    face2d = to_rows(face_pred, NUM_FACE_LANDMARKS)
    body2d = to_rows(body_pred, NUM_BODY_LANDMARKS)
    pbody2d = to_rows(pose_body_pred, NUM_BODY_LANDMARKS)

    # features go in un-padded; full-array BlockSpec does not require 128-lane divisibility.
    F = body_feat.shape[-1]
    bfeat2d = body_feat.astype(f32).reshape(N, F)
    pbfeat2d = pose_body_feat.astype(f32).reshape(N, F)

    fb1 = jnp.reshape(face_body_loss, (1,)).astype(f32)       # SMEM scalar input

    pred2d, recon2d, losses_vec = _fused_pose_losses(
        gt2d, face2d, body2d, pbody2d, bfeat2d, pbfeat2d,
        condition_code.astype(f32), fb1, B=B, T=T, C=C)

    # back to [B, T, C, 121]: free reshape of the (R,128) slab, then one fused transpose+slice.
    def from_rows(x2d):
        x4 = x2d.reshape(C, B, T, LANE_W)
        return jnp.transpose(x4, (1, 2, 0, 3))[..., :NUM_LANDMARKS]

    poses_pred_batch = from_rows(pred2d)
    poses_recon_batch = from_rows(recon2d)

    s = losses_vec
    losses = {
        'face_body_correlation_loss': s[L_FACE_BODY],
        'sim_loss': s[L_SIM],
        'recon_loss': s[L_RECON],
        'G_reg_loss': s[L_GREG],
        'Face_reg_loss': s[L_FACE_REG],
        'Body_reg_loss': s[L_BODY_REG],
        'Huber_loss': s[L_HUBER],
        'Forearm_direction_loss': s[L_FOREARM],
        'Arm_direction_loss': s[L_ARM],
        # original only adds this key when (var != 0).all(); here it is always present, masked to 0
        'G_clipcode_kl_loss': s[L_KL],
        'G_loss': s[L_GLOSS],
    }

    results = {
        'poses_pred_batch': poses_pred_batch,
        'condition_code': condition_code,
        'poses_recon_batch': poses_recon_batch,
        'poses_gt_batch': poses_gt,
    }
    return losses, results


# --------------------------------- main --------------------------------------
if __name__ == "__main__":
    B, T, C, L = 2, 8, 2, NUM_LANDMARKS
    FEAT_DIM = 32

    key = jax.random.PRNGKey(0)
    keys = jax.random.split(key, 8)

    # "parameter": clips_code [num_train_samples, CLIP_CODE_DIM]. The original __init__ zero-inits
    # it (a trainable nn.Parameter); we init deterministically non-zero so that the clip-code KL
    # branch (var != 0) is exercised.
    clips_code = 0.1 * jax.random.normal(keys[0], (NUM_TRAIN_SAMPLES, CLIP_CODE_DIM), jnp.float32)
    clip_indices = jnp.array([3, 7], dtype=jnp.int32)

    # batch ground-truth poses and synthetic netG (HierarchicalPoseGenerator) outputs
    poses_gt = 0.2 * jax.random.normal(keys[1], (B, T, C, L), jnp.float32)
    face_pred = 0.2 * jax.random.normal(keys[2], (B, T, C, NUM_FACE_LANDMARKS), jnp.float32)
    body_pred = 0.2 * jax.random.normal(keys[3], (B, T, C, NUM_BODY_LANDMARKS), jnp.float32)
    pose_body_pred = 0.2 * jax.random.normal(keys[4], (B, T, C, NUM_BODY_LANDMARKS), jnp.float32)
    body_feat = jax.random.normal(keys[5], (B, T, FEAT_DIM), jnp.float32)
    pose_body_feat = jax.random.normal(keys[6], (B, T, FEAT_DIM), jnp.float32)
    face_body_loss = jnp.asarray(0.05, jnp.float32)

    fwd = jax.jit(joint2pose_forward)
    losses_dict, results_dict = fwd(clips_code, clip_indices, poses_gt,
                                    face_pred, body_pred, pose_body_pred,
                                    body_feat, pose_body_feat, face_body_loss)
    jax.block_until_ready(losses_dict['G_loss'])
    jax.block_until_ready(results_dict['poses_pred_batch'])
    print("KERNEL_OK")
</pallas_src>

<mosaic_0001>
module attributes {stable_mosaic.version = 11 : i64} {
  func.func @_joint2pose_kernel(%arg0: memref<32x128xf32, #tpu.memory_space<vmem>>, %arg1: memref<32x128xf32, #tpu.memory_space<vmem>>, %arg2: memref<32x128xf32, #tpu.memory_space<vmem>>, %arg3: memref<32x128xf32, #tpu.memory_space<vmem>>, %arg4: memref<16x32xf32, #tpu.memory_space<vmem>>, %arg5: memref<16x32xf32, #tpu.memory_space<vmem>>, %arg6: memref<2x8xf32, #tpu.memory_space<vmem>>, %arg7: memref<1xf32, #tpu.memory_space<smem>>, %arg8: memref<32x128xf32, #tpu.memory_space<vmem>>, %arg9: memref<32x128xf32, #tpu.memory_space<vmem>>, %arg10: memref<11xf32, #tpu.memory_space<smem>>) attributes {dimension_semantics = [], scalar_prefetch = 0 : i64, scratch_operands = 0 : i64, tpu.core_type = #tpu.core_type<tc>} {
    %c0 = arith.constant 0 : index
    %c0_0 = arith.constant 0 : index
    %0 = vector.load %arg0[%c0, %c0_0] : memref<32x128xf32, #tpu.memory_space<vmem>>, vector<32x128xf32>
    %c0_1 = arith.constant 0 : index
    %c0_2 = arith.constant 0 : index
    %1 = vector.load %arg1[%c0_1, %c0_2] : memref<32x128xf32, #tpu.memory_space<vmem>>, vector<32x128xf32>
    %c0_3 = arith.constant 0 : index
    %c0_4 = arith.constant 0 : index
    %2 = vector.load %arg2[%c0_3, %c0_4] : memref<32x128xf32, #tpu.memory_space<vmem>>, vector<32x128xf32>
    %c0_5 = arith.constant 0 : index
    %c0_6 = arith.constant 0 : index
    %3 = vector.load %arg3[%c0_5, %c0_6] : memref<32x128xf32, #tpu.memory_space<vmem>>, vector<32x128xf32>
    %4 = tpu.iota {dimensions = array<i32: 1>} : vector<1x128xi32>
    %c9_i32 = arith.constant 9 : i32
    %5 = vector.broadcast %c9_i32 : i32 to vector<1x128xi32>
    %6 = arith.cmpi slt, %4, %5 : vector<1x128xi32>
    %c9_i32_7 = arith.constant 9 : i32
    %7 = vector.broadcast %c9_i32_7 : i32 to vector<1x128xi32>
    %8 = arith.cmpi sge, %4, %7 : vector<1x128xi32>
    %c79_i32 = arith.constant 79 : i32
    %9 = vector.broadcast %c79_i32 : i32 to vector<1x128xi32>
    %10 = arith.cmpi slt, %4, %9 : vector<1x128xi32>
    %11 = arith.andi %8, %10 : vector<1x128xi1>
    %c79_i32_8 = arith.constant 79 : i32
    %12 = vector.broadcast %c79_i32_8 : i32 to vector<1x128xi32>
    %13 = arith.cmpi sge, %4, %12 : vector<1x128xi32>
    %c121_i32 = arith.constant 121 : i32
    %14 = vector.broadcast %c121_i32 : i32 to vector<1x128xi32>
    %15 = arith.cmpi slt, %4, %14 : vector<1x128xi32>
    %16 = arith.andi %13, %15 : vector<1x128xi1>
    %c70_i32 = arith.constant 70 : i32
    %17 = vector.broadcast %c70_i32 : i32 to vector<1x128xi32>
    %18 = arith.cmpi slt, %4, %17 : vector<1x128xi32>
    %c9_i32_9 = arith.constant 9 : i32
    %19 = vector.broadcast %c9_i32_9 : i32 to vector<1x128xi32>
    %20 = arith.cmpi sge, %4, %19 : vector<1x128xi32>
    %c51_i32 = arith.constant 51 : i32
    %21 = vector.broadcast %c51_i32 : i32 to vector<1x128xi32>
    %22 = arith.cmpi slt, %4, %21 : vector<1x128xi32>
    %23 = arith.andi %20, %22 : vector<1x128xi1>
    %cst = arith.constant 0.000000e+00 : f32
    %24 = vector.broadcast %cst : f32 to vector<32x128xf32>
    %25 = vector.extract_strided_slice %2 {offsets = [0, 0], sizes = [32, 1], strides = [1, 1]} : vector<32x128xf32> to vector<32x1xf32>
    %26 = vector.extract_strided_slice %0 {offsets = [0, 0], sizes = [32, 1], strides = [1, 1]} : vector<32x128xf32> to vector<32x1xf32>
    %c9_i32_10 = arith.constant 9 : i32
    %27 = tpu.dynamic_rotate %1 by %c9_i32_10 dim 1 : vector<32x128xf32>, i32 -> vector<32x128xf32>
    %c70_i32_11 = arith.constant 70 : i32
    %28 = tpu.dynamic_rotate %2 by %c70_i32_11 dim 1 : vector<32x128xf32>, i32 -> vector<32x128xf32>
    %c70_i32_12 = arith.constant 70 : i32
    %29 = tpu.dynamic_rotate %3 by %c70_i32_12 dim 1 : vector<32x128xf32>, i32 -> vector<32x128xf32>
    %c119_i32 = arith.constant 119 : i32
    %30 = tpu.dynamic_rotate %0 by %c119_i32 dim 1 : vector<32x128xf32>, i32 -> vector<32x128xf32>
    %c58_i32 = arith.constant 58 : i32
    %31 = tpu.dynamic_rotate %0 by %c58_i32 dim 1 : vector<32x128xf32>, i32 -> vector<32x128xf32>
    %32 = vector.shape_cast %6 : vector<1x128xi1> to vector<1x128xi1>
    %33 = vector.broadcast %32 : vector<1x128xi1> to vector<32x128xi1>
    %34 = arith.select %33, %2, %24 : vector<32x128xi1>, vector<32x128xf32>
    %35 = vector.broadcast %25 : vector<32x1xf32> to vector<32x128xf32>
    %36 = arith.addf %27, %35 : vector<32x128xf32>
    %37 = vector.shape_cast %11 : vector<1x128xi1> to vector<1x128xi1>
    %38 = vector.broadcast %37 : vector<1x128xi1> to vector<32x128xi1>
    %39 = arith.select %38, %36, %34 : vector<32x128xi1>, vector<32x128xf32>
    %40 = vector.shape_cast %16 : vector<1x128xi1> to vector<1x128xi1>
    %41 = vector.broadcast %40 : vector<1x128xi1> to vector<32x128xi1>
    %42 = arith.select %41, %28, %39 : vector<32x128xi1>, vector<32x128xf32>
    %c0_13 = arith.constant 0 : index
    %c0_14 = arith.constant 0 : index
    %43 = vector.load %arg8[%c0_13, %c0_14] : memref<32x128xf32, #tpu.memory_space<vmem>>, vector<32x128xf32>
    tpu.vector_store %arg8[%c0_13, %c0_14], %42 {strides = array<i32>} : memref<32x128xf32, #tpu.memory_space<vmem>>, vector<32x128xf32>,
    %44 = vector.shape_cast %6 : vector<1x128xi1> to vector<1x128xi1>
    %45 = vector.broadcast %44 : vector<1x128xi1> to vector<32x128xi1>
    %46 = arith.select %45, %3, %24 : vector<32x128xi1>, vector<32x128xf32>
    %47 = vector.shape_cast %11 : vector<1x128xi1> to vector<1x128xi1>
    %48 = vector.broadcast %47 : vector<1x128xi1> to vector<32x128xi1>
    %49 = arith.select %48, %0, %46 : vector<32x128xi1>, vector<32x128xf32>
    %50 = vector.shape_cast %16 : vector<1x128xi1> to vector<1x128xi1>
    %51 = vector.broadcast %50 : vector<1x128xi1> to vector<32x128xi1>
    %52 = arith.select %51, %29, %49 : vector<32x128xi1>, vector<32x128xf32>
    %c0_15 = arith.constant 0 : index
    %c0_16 = arith.constant 0 : index
    %53 = vector.load %arg9[%c0_15, %c0_16] : memref<32x128xf32, #tpu.memory_space<vmem>>, vector<32x128xf32>
    tpu.vector_store %arg9[%c0_15, %c0_16], %52 {strides = array<i32>} : memref<32x128xf32, #tpu.memory_space<vmem>>, vector<32x128xf32>,
    %54 = vector.broadcast %26 : vector<32x1xf32> to vector<32x128xf32>
    %55 = arith.subf %30, %54 : vector<32x128xf32>
    %56 = vector.shape_cast %18 : vector<1x128xi1> to vector<1x128xi1>
    %57 = vector.broadcast %56 : vector<1x128xi1> to vector<32x128xi1>
    %58 = arith.select %57, %55, %24 : vector<32x128xi1>, vector<32x128xf32>
    %59 = vector.shape_cast %6 : vector<1x128xi1> to vector<1x128xi1>
    %60 = vector.broadcast %59 : vector<1x128xi1> to vector<32x128xi1>
    %61 = arith.select %60, %0, %24 : vector<32x128xi1>, vector<32x128xf32>
    %62 = vector.shape_cast %23 : vector<1x128xi1> to vector<1x128xi1>
    %63 = vector.broadcast %62 : vector<1x128xi1> to vector<32x128xi1>
    %64 = arith.select %63, %31, %61 : vector<32x128xi1>, vector<32x128xf32>
    %65 = arith.subf %3, %64 : vector<32x128xf32>
    %66 = math.absf %65 : vector<32x128xf32>
    %cst_17 = arith.constant 1.000000e+00 : f32
    %67 = vector.broadcast %cst_17 : f32 to vector<32x128xf32>
    %68 = arith.cmpf olt, %66, %67 : vector<32x128xf32>
    %cst_18 = arith.constant 5.000000e-01 : f32
    %69 = vector.broadcast %cst_18 : f32 to vector<32x128xf32>
    %70 = arith.mulf %69, %66 : vector<32x128xf32>
    %71 = arith.mulf %70, %66 : vector<32x128xf32>
    %cst_19 = arith.constant 5.000000e-01 : f32
    %72 = vector.broadcast %cst_19 : f32 to vector<32x128xf32>
    %73 = arith.subf %66, %72 : vector<32x128xf32>
    %74 = arith.select %68, %71, %73 : vector<32x128xi1>, vector<32x128xf32>
    %cst_20 = arith.constant dense<0.000000e+00> : vector<128xf32>
    %75 = vector.multi_reduction <add>, %74, %cst_20 [0] : vector<32x128xf32> to vector<128xf32>
    %76 = vector.shape_cast %75 : vector<128xf32> to vector<1x128xf32>
    %77 = vector.shape_cast %76 : vector<1x128xf32> to vector<1x1x128xf32>
    %cst_21 = arith.constant dense<0.000000e+00> : vector<1xf32>
    %78 = vector.multi_reduction <add>, %77, %cst_21 [1, 2] : vector<1x1x128xf32> to vector<1xf32>
    %79 = vector.shape_cast %78 : vector<1xf32> to vector<1x1x1xf32>
    %80 = vector.extract %79[0, 0, 0] : f32 from vector<1x1x1xf32>
    %81 = arith.subf %1, %58 : vector<32x128xf32>
    %82 = math.absf %81 : vector<32x128xf32>
    %cst_22 = arith.constant 1.000000e+00 : f32
    %83 = vector.broadcast %cst_22 : f32 to vector<32x128xf32>
    %84 = arith.cmpf olt, %82, %83 : vector<32x128xf32>
    %cst_23 = arith.constant 5.000000e-01 : f32
    %85 = vector.broadcast %cst_23 : f32 to vector<32x128xf32>
    %86 = arith.mulf %85, %82 : vector<32x128xf32>
    %87 = arith.mulf %86, %82 : vector<32x128xf32>
    %cst_24 = arith.constant 5.000000e-01 : f32
    %88 = vector.broadcast %cst_24 : f32 to vector<32x128xf32>
    %89 = arith.subf %82, %88 : vector<32x128xf32>
    %90 = arith.select %84, %87, %89 : vector<32x128xi1>, vector<32x128xf32>
    %cst_25 = arith.constant dense<0.000000e+00> : vector<128xf32>
    %91 = vector.multi_reduction <add>, %90, %cst_25 [0] : vector<32x128xf32> to vector<128xf32>
    %92 = vector.shape_cast %91 : vector<128xf32> to vector<1x128xf32>
    %93 = vector.shape_cast %92 : vector<1x128xf32> to vector<1x1x128xf32>
    %cst_26 = arith.constant dense<0.000000e+00> : vector<1xf32>
    %94 = vector.multi_reduction <add>, %93, %cst_26 [1, 2] : vector<1x1x128xf32> to vector<1xf32>
    %95 = vector.shape_cast %94 : vector<1xf32> to vector<1x1x1xf32>
    %96 = vector.extract %95[0, 0, 0] : f32 from vector<1x1x1xf32>
    %97 = arith.subf %2, %64 : vector<32x128xf32>
    %98 = math.absf %97 : vector<32x128xf32>
    %cst_27 = arith.constant 1.000000e+00 : f32
    %99 = vector.broadcast %cst_27 : f32 to vector<32x128xf32>
    %100 = arith.cmpf olt, %98, %99 : vector<32x128xf32>
    %cst_28 = arith.constant 5.000000e-01 : f32
    %101 = vector.broadcast %cst_28 : f32 to vector<32x128xf32>
    %102 = arith.mulf %101, %98 : vector<32x128xf32>
    %103 = arith.mulf %102, %98 : vector<32x128xf32>
    %cst_29 = arith.constant 5.000000e-01 : f32
    %104 = vector.broadcast %cst_29 : f32 to vector<32x128xf32>
    %105 = arith.subf %98, %104 : vector<32x128xf32>
    %106 = arith.select %100, %103, %105 : vector<32x128xi1>, vector<32x128xf32>
    %cst_30 = arith.constant dense<0.000000e+00> : vector<128xf32>
    %107 = vector.multi_reduction <add>, %106, %cst_30 [0] : vector<32x128xf32> to vector<128xf32>
    %108 = vector.shape_cast %107 : vector<128xf32> to vector<1x128xf32>
    %109 = vector.shape_cast %108 : vector<1x128xf32> to vector<1x1x128xf32>
    %cst_31 = arith.constant dense<0.000000e+00> : vector<1xf32>
    %110 = vector.multi_reduction <add>, %109, %cst_31 [1, 2] : vector<1x1x128xf32> to vector<1xf32>
    %111 = vector.shape_cast %110 : vector<1xf32> to vector<1x1x1xf32>
    %112 = vector.extract %111[0, 0, 0] : f32 from vector<1x1x1xf32>
    %113 = arith.subf %42, %0 : vector<32x128xf32>
    %114 = math.absf %113 : vector<32x128xf32>
    %cst_32 = arith.constant dense<0.000000e+00> : vector<128xf32>
    %115 = vector.multi_reduction <add>, %114, %cst_32 [0] : vector<32x128xf32> to vector<128xf32>
    %116 = vector.shape_cast %115 : vector<128xf32> to vector<1x128xf32>
    %117 = vector.shape_cast %116 : vector<1x128xf32> to vector<1x1x128xf32>
    %cst_33 = arith.constant dense<0.000000e+00> : vector<1xf32>
    %118 = vector.multi_reduction <add>, %117, %cst_33 [1, 2] : vector<1x1x128xf32> to vector<1xf32>
    %119 = vector.shape_cast %118 : vector<1xf32> to vector<1x1x1xf32>
    %120 = vector.extract %119[0, 0, 0] : f32 from vector<1x1x1xf32>
    %c0_34 = arith.constant 0 : index
    %c0_35 = arith.constant 0 : index
    %121 = vector.load %arg4[%c0_34, %c0_35] : memref<16x32xf32, #tpu.memory_space<vmem>>, vector<16x32xf32>
    %c0_36 = arith.constant 0 : index
    %c0_37 = arith.constant 0 : index
    %122 = vector.load %arg5[%c0_36, %c0_37] : memref<16x32xf32, #tpu.memory_space<vmem>>, vector<16x32xf32>
    %123 = arith.mulf %121, %122 : vector<16x32xf32>
    %cst_38 = arith.constant dense<0.000000e+00> : vector<16xf32>
    %124 = vector.multi_reduction <add>, %123, %cst_38 [1] : vector<16x32xf32> to vector<16xf32>
    %125 = vector.shape_cast %124 : vector<16xf32> to vector<16x1xf32>
    %126 = arith.mulf %121, %121 : vector<16x32xf32>
    %cst_39 = arith.constant dense<0.000000e+00> : vector<16xf32>
    %127 = vector.multi_reduction <add>, %126, %cst_39 [1] : vector<16x32xf32> to vector<16xf32>
    %128 = vector.shape_cast %127 : vector<16xf32> to vector<16x1xf32>
    %129 = arith.mulf %122, %122 : vector<16x32xf32>
    %cst_40 = arith.constant dense<0.000000e+00> : vector<16xf32>
    %130 = vector.multi_reduction <add>, %129, %cst_40 [1] : vector<16x32xf32> to vector<16xf32>
    %131 = vector.shape_cast %130 : vector<16xf32> to vector<16x1xf32>
    %cst_41 = arith.constant 1.000000e-16 : f32
    %132 = vector.broadcast %cst_41 : f32 to vector<16x1xf32>
    %133 = arith.maximumf %128, %132 : vector<16x1xf32>
    %134 = math.rsqrt %133 : vector<16x1xf32>
    %135 = arith.mulf %125, %134 : vector<16x1xf32>
    %cst_42 = arith.constant 1.000000e-16 : f32
    %136 = vector.broadcast %cst_42 : f32 to vector<16x1xf32>
    %137 = arith.maximumf %131, %136 : vector<16x1xf32>
    %138 = math.rsqrt %137 : vector<16x1xf32>
    %139 = arith.mulf %135, %138 : vector<16x1xf32>
    %cst_43 = arith.constant 1.000000e+00 : f32
    %140 = vector.broadcast %cst_43 : f32 to vector<16x1xf32>
    %141 = arith.subf %140, %139 : vector<16x1xf32>
    %142 = vector.shape_cast %141 : vector<16x1xf32> to vector<1x16x1xf32>
    %cst_44 = arith.constant dense<0.000000e+00> : vector<1xf32>
    %143 = vector.multi_reduction <add>, %142, %cst_44 [1, 2] : vector<1x16x1xf32> to vector<1xf32>
    %144 = vector.shape_cast %143 : vector<1xf32> to vector<1x1x1xf32>
    %145 = vector.extract %144[0, 0, 0] : f32 from vector<1x1x1xf32>
    %cst_45 = arith.constant 1.600000e+01 : f32
    %146 = arith.divf %145, %cst_45 : f32
    %147 = vector.extract_strided_slice %42 {offsets = [0, 0], sizes = [16, 128], strides = [1, 1]} : vector<32x128xf32> to vector<16x128xf32>
    %148 = vector.extract_strided_slice %42 {offsets = [16, 0], sizes = [16, 128], strides = [1, 1]} : vector<32x128xf32> to vector<16x128xf32>
    %149 = vector.extract_strided_slice %0 {offsets = [0, 0], sizes = [16, 128], strides = [1, 1]} : vector<32x128xf32> to vector<16x128xf32>
    %150 = vector.extract_strided_slice %0 {offsets = [16, 0], sizes = [16, 128], strides = [1, 1]} : vector<32x128xf32> to vector<16x128xf32>
    %c1_i32 = arith.constant 1 : i32
    %151 = tpu.dynamic_rotate %147 by %c1_i32 dim 1 : vector<16x128xf32>, i32 -> vector<16x128xf32>
    %152 = arith.subf %147, %151 : vector<16x128xf32>
    %c1_i32_46 = arith.constant 1 : i32
    %153 = tpu.dynamic_rotate %148 by %c1_i32_46 dim 1 : vector<16x128xf32>, i32 -> vector<16x128xf32>
    %154 = arith.subf %148, %153 : vector<16x128xf32>
    %c1_i32_47 = arith.constant 1 : i32
    %155 = tpu.dynamic_rotate %149 by %c1_i32_47 dim 1 : vector<16x128xf32>, i32 -> vector<16x128xf32>
    %156 = arith.subf %149, %155 : vector<16x128xf32>
    %c1_i32_48 = arith.constant 1 : i32
    %157 = tpu.dynamic_rotate %150 by %c1_i32_48 dim 1 : vector<16x128xf32>, i32 -> vector<16x128xf32>
    %158 = arith.subf %150, %157 : vector<16x128xf32>
    %159 = arith.mulf %152, %156 : vector<16x128xf32>
    %160 = arith.mulf %154, %158 : vector<16x128xf32>
    %161 = arith.addf %159, %160 : vector<16x128xf32>
    %162 = arith.mulf %152, %152 : vector<16x128xf32>
    %163 = arith.mulf %154, %154 : vector<16x128xf32>
    %164 = arith.addf %162, %163 : vector<16x128xf32>
    %165 = arith.mulf %156, %156 : vector<16x128xf32>
    %166 = arith.mulf %158, %158 : vector<16x128xf32>
    %167 = arith.addf %165, %166 : vector<16x128xf32>
    %cst_49 = arith.constant 1.000000e-16 : f32
    %168 = vector.broadcast %cst_49 : f32 to vector<16x128xf32>
    %169 = arith.maximumf %164, %168 : vector<16x128xf32>
    %170 = math.rsqrt %169 : vector<16x128xf32>
    %171 = arith.mulf %161, %170 : vector<16x128xf32>
    %cst_50 = arith.constant 1.000000e-16 : f32
    %172 = vector.broadcast %cst_50 : f32 to vector<16x128xf32>
    %173 = arith.maximumf %167, %172 : vector<16x128xf32>
    %174 = math.rsqrt %173 : vector<16x128xf32>
    %175 = arith.mulf %171, %174 : vector<16x128xf32>
    %176 = arith.mulf %175, %175 : vector<16x128xf32>
    %177 = arith.mulf %176, %176 : vector<16x128xf32>
    %178 = arith.mulf %177, %177 : vector<16x128xf32>
    %179 = arith.mulf %178, %178 : vector<16x128xf32>
    %180 = arith.mulf %179, %179 : vector<16x128xf32>
    %181 = arith.mulf %180, %180 : vector<16x128xf32>
    %182 = arith.mulf %181, %180 : vector<16x128xf32>
    %183 = arith.mulf %182, %177 : vector<16x128xf32>
    %cst_51 = arith.constant dense<0.000000e+00> : vector<128xf32>
    %184 = vector.multi_reduction <add>, %183, %cst_51 [0] : vector<16x128xf32> to vector<128xf32>
    %185 = vector.shape_cast %184 : vector<128xf32> to vector<1x128xf32>
    %c2_i32 = arith.constant 2 : i32
    %186 = vector.broadcast %c2_i32 : i32 to vector<1x128xi32>
    %187 = arith.cmpi eq, %4, %186 : vector<1x128xi32>
    %cst_52 = arith.constant 0.000000e+00 : f32
    %188 = vector.broadcast %cst_52 : f32 to vector<1x128xf32>
    %189 = arith.select %187, %185, %188 : vector<1x128xi1>, vector<1x128xf32>
    %190 = vector.shape_cast %189 : vector<1x128xf32> to vector<1x1x128xf32>
    %cst_53 = arith.constant dense<0.000000e+00> : vector<1xf32>
    %191 = vector.multi_reduction <add>, %190, %cst_53 [1, 2] : vector<1x1x128xf32> to vector<1xf32>
    %192 = vector.shape_cast %191 : vector<1xf32> to vector<1x1x1xf32>
    %193 = vector.extract %192[0, 0, 0] : f32 from vector<1x1x1xf32>
    %cst_54 = arith.constant 6.250000e-02 : f32
    %194 = arith.mulf %193, %cst_54 : f32
    %c3_i32 = arith.constant 3 : i32
    %195 = vector.broadcast %c3_i32 : i32 to vector<1x128xi32>
    %196 = arith.cmpi eq, %4, %195 : vector<1x128xi32>
    %cst_55 = arith.constant 0.000000e+00 : f32
    %197 = vector.broadcast %cst_55 : f32 to vector<1x128xf32>
    %198 = arith.select %196, %185, %197 : vector<1x128xi1>, vector<1x128xf32>
    %199 = vector.shape_cast %198 : vector<1x128xf32> to vector<1x1x128xf32>
    %cst_56 = arith.constant dense<0.000000e+00> : vector<1xf32>
    %200 = vector.multi_reduction <add>, %199, %cst_56 [1, 2] : vector<1x1x128xf32> to vector<1xf32>
    %201 = vector.shape_cast %200 : vector<1xf32> to vector<1x1x1xf32>
    %202 = vector.extract %201[0, 0, 0] : f32 from vector<1x1x1xf32>
    %cst_57 = arith.constant 6.250000e-02 : f32
    %203 = arith.mulf %202, %cst_57 : f32
    %c5_i32 = arith.constant 5 : i32
    %204 = vector.broadcast %c5_i32 : i32 to vector<1x128xi32>
    %205 = arith.cmpi eq, %4, %204 : vector<1x128xi32>
    %cst_58 = arith.constant 0.000000e+00 : f32
    %206 = vector.broadcast %cst_58 : f32 to vector<1x128xf32>
    %207 = arith.select %205, %185, %206 : vector<1x128xi1>, vector<1x128xf32>
    %208 = vector.shape_cast %207 : vector<1x128xf32> to vector<1x1x128xf32>
    %cst_59 = arith.constant dense<0.000000e+00> : vector<1xf32>
    %209 = vector.multi_reduction <add>, %208, %cst_59 [1, 2] : vector<1x1x128xf32> to vector<1xf32>
    %210 = vector.shape_cast %209 : vector<1xf32> to vector<1x1x1xf32>
    %211 = vector.extract %210[0, 0, 0] : f32 from vector<1x1x1xf32>
    %cst_60 = arith.constant 6.250000e-02 : f32
    %212 = arith.mulf %211, %cst_60 : f32
    %c6_i32 = arith.constant 6 : i32
    %213 = vector.broadcast %c6_i32 : i32 to vector<1x128xi32>
    %214 = arith.cmpi eq, %4, %213 : vector<1x128xi32>
    %cst_61 = arith.constant 0.000000e+00 : f32
    %215 = vector.broadcast %cst_61 : f32 to vector<1x128xf32>
    %216 = arith.select %214, %185, %215 : vector<1x128xi1>, vector<1x128xf32>
    %217 = vector.shape_cast %216 : vector<1x128xf32> to vector<1x1x128xf32>
    %cst_62 = arith.constant dense<0.000000e+00> : vector<1xf32>
    %218 = vector.multi_reduction <add>, %217, %cst_62 [1, 2] : vector<1x1x128xf32> to vector<1xf32>
    %219 = vector.shape_cast %218 : vector<1xf32> to vector<1x1x1xf32>
    %220 = vector.extract %219[0, 0, 0] : f32 from vector<1x1x1xf32>
    %cst_63 = arith.constant 6.250000e-02 : f32
    %221 = arith.mulf %220, %cst_63 : f32
    %c0_64 = arith.constant 0 : index
    %c0_65 = arith.constant 0 : index
    %222 = vector.load %arg6[%c0_64, %c0_65] : memref<2x8xf32, #tpu.memory_space<vmem>>, vector<2x8xf32>
    %cst_66 = arith.constant dense<0.000000e+00> : vector<8xf32>
    %223 = vector.multi_reduction <add>, %222, %cst_66 [0] : vector<2x8xf32> to vector<8xf32>
    %224 = vector.shape_cast %223 : vector<8xf32> to vector<1x8xf32>
    %cst_67 = arith.constant 2.000000e+00 : f32
    %225 = vector.broadcast %cst_67 : f32 to vector<1x8xf32>
    %226 = arith.divf %224, %225 : vector<1x8xf32>
    %227 = vector.broadcast %226 : vector<1x8xf32> to vector<2x8xf32>
    %228 = arith.subf %222, %227 : vector<2x8xf32>
    %229 = vector.broadcast %226 : vector<1x8xf32> to vector<2x8xf32>
    %230 = arith.subf %222, %229 : vector<2x8xf32>
    %231 = arith.mulf %228, %230 : vector<2x8xf32>
    %cst_68 = arith.constant dense<0.000000e+00> : vector<8xf32>
    %232 = vector.multi_reduction <add>, %231, %cst_68 [0] : vector<2x8xf32> to vector<8xf32>
    %233 = vector.shape_cast %232 : vector<8xf32> to vector<1x8xf32>
    %cst_69 = arith.constant 1.000000e+00 : f32
    %234 = vector.broadcast %cst_69 : f32 to vector<1x8xf32>
    %235 = arith.divf %233, %234 : vector<1x8xf32>
    %cst_70 = arith.constant 0.000000e+00 : f32
    %236 = vector.broadcast %cst_70 : f32 to vector<1x8xf32>
    %237 = arith.cmpf ogt, %235, %236 : vector<1x8xf32>
    %cst_71 = arith.constant 1.000000e+00 : f32
    %238 = vector.broadcast %cst_71 : f32 to vector<1x8xf32>
    %239 = arith.select %237, %235, %238 : vector<1x8xi1>, vector<1x8xf32>
    %240 = math.log %239 : vector<1x8xf32>
    %cst_72 = arith.constant 0.000000e+00 : f32
    %241 = vector.broadcast %cst_72 : f32 to vector<1x8xf32>
    %242 = arith.subf %241, %240 : vector<1x8xf32>
    %243 = arith.mulf %226, %226 : vector<1x8xf32>
    %244 = arith.addf %242, %243 : vector<1x8xf32>
    %245 = arith.addf %244, %235 : vector<1x8xf32>
    %cst_73 = arith.constant 1.000000e+00 : f32
    %246 = vector.broadcast %cst_73 : f32 to vector<1x8xf32>
    %247 = arith.subf %245, %246 : vector<1x8xf32>
    %248 = vector.shape_cast %247 : vector<1x8xf32> to vector<1x1x8xf32>
    %cst_74 = arith.constant dense<0.000000e+00> : vector<1xf32>
    %249 = vector.multi_reduction <add>, %248, %cst_74 [1, 2] : vector<1x1x8xf32> to vector<1xf32>
    %250 = vector.shape_cast %249 : vector<1xf32> to vector<1x1x1xf32>
    %251 = vector.extract %250[0, 0, 0] : f32 from vector<1x1x1xf32>
    %cst_75 = arith.constant 8.000000e+00 : f32
    %252 = arith.divf %251, %cst_75 : f32
    %cst_76 = arith.constant 5.000000e-01 : f32
    %253 = arith.mulf %cst_76, %252 : f32
    %cst_77 = arith.constant 1.000000e+00 : f32
    %254 = arith.mulf %253, %cst_77 : f32
    %cst_78 = arith.constant 0.000000e+00 : f32
    %255 = vector.broadcast %cst_78 : f32 to vector<1x8xf32>
    %256 = arith.cmpf ogt, %235, %255 : vector<1x8xf32>
    %cst_79 = arith.constant 1.000000e+00 : f32
    %cst_80 = arith.constant 0.000000e+00 : f32
    %257 = vector.broadcast %cst_79 : f32 to vector<1x8xf32>
    %258 = vector.broadcast %cst_80 : f32 to vector<1x8xf32>
    %259 = arith.select %256, %257, %258 : vector<1x8xi1>, vector<1x8xf32>
    %260 = vector.shape_cast %259 : vector<1x8xf32> to vector<1x1x8xf32>
    %cst_81 = arith.constant dense<0x7F800000> : vector<1xf32>
    %261 = vector.multi_reduction <minimumf>, %260, %cst_81 [1, 2] : vector<1x1x8xf32> to vector<1xf32>
    %262 = vector.shape_cast %261 : vector<1xf32> to vector<1x1x1xf32>
    %263 = vector.extract %262[0, 0, 0] : f32 from vector<1x1x1xf32>
    %264 = arith.mulf %254, %263 : f32
    %c0_82 = arith.constant 0 : index
    %265 = memref.load %arg7[%c0_82] : memref<1xf32, #tpu.memory_space<smem>>
    %cst_83 = arith.constant 0.0122549022 : f32
    %266 = arith.mulf %80, %cst_83 : f32
    %cst_84 = arith.constant 2.58264452E-4 : f32
    %267 = arith.mulf %120, %cst_84 : f32
    %cst_85 = arith.constant 2.000000e+01 : f32
    %268 = arith.mulf %96, %cst_85 : f32
    %cst_86 = arith.constant 2.000000e+01 : f32
    %269 = arith.mulf %112, %cst_86 : f32
    %cst_87 = arith.constant 2.240000e+03 : f32
    %270 = arith.divf %268, %cst_87 : f32
    %cst_88 = arith.constant 1.632000e+03 : f32
    %271 = arith.divf %269, %cst_88 : f32
    %272 = arith.addf %268, %269 : f32
    %cst_89 = arith.constant 3.872000e+03 : f32
    %273 = arith.divf %272, %cst_89 : f32
    %cst_90 = arith.constant 1.000000e+00 : f32
    %274 = arith.subf %cst_90, %221 : f32
    %cst_91 = arith.constant 1.000000e+00 : f32
    %275 = arith.subf %cst_91, %203 : f32
    %276 = arith.addf %274, %275 : f32
    %cst_92 = arith.constant 1.000000e+00 : f32
    %277 = arith.subf %cst_92, %212 : f32
    %cst_93 = arith.constant 1.000000e+00 : f32
    %278 = arith.subf %cst_93, %194 : f32
    %279 = arith.addf %277, %278 : f32
    %280 = arith.addf %267, %273 : f32
    %281 = arith.addf %280, %276 : f32
    %282 = arith.addf %281, %279 : f32
    %283 = arith.addf %282, %146 : f32
    %284 = arith.addf %283, %266 : f32
    %285 = arith.addf %284, %265 : f32
    %286 = arith.addf %285, %264 : f32
    %c0_94 = arith.constant 0 : index
    %287 = memref.load %arg10[%c0_94] : memref<11xf32, #tpu.memory_space<smem>>
    memref.store %265, %arg10[%c0_94] : memref<11xf32, #tpu.memory_space<smem>>
    %c1 = arith.constant 1 : index
    %288 = memref.load %arg10[%c1] : memref<11xf32, #tpu.memory_space<smem>>
    memref.store %146, %arg10[%c1] : memref<11xf32, #tpu.memory_space<smem>>
    %c2 = arith.constant 2 : index
    %289 = memref.load %arg10[%c2] : memref<11xf32, #tpu.memory_space<smem>>
    memref.store %266, %arg10[%c2] : memref<11xf32, #tpu.memory_space<smem>>
    %c3 = arith.constant 3 : index
    %290 = memref.load %arg10[%c3] : memref<11xf32, #tpu.memory_space<smem>>
    memref.store %267, %arg10[%c3] : memref<11xf32, #tpu.memory_space<smem>>
    %c4 = arith.constant 4 : index
    %291 = memref.load %arg10[%c4] : memref<11xf32, #tpu.memory_space<smem>>
    memref.store %270, %arg10[%c4] : memref<11xf32, #tpu.memory_space<smem>>
    %c5 = arith.constant 5 : index
    %292 = memref.load %arg10[%c5] : memref<11xf32, #tpu.memory_space<smem>>
    memref.store %271, %arg10[%c5] : memref<11xf32, #tpu.memory_space<smem>>
    %c6 = arith.constant 6 : index
    %293 = memref.load %arg10[%c6] : memref<11xf32, #tpu.memory_space<smem>>
    memref.store %273, %arg10[%c6] : memref<11xf32, #tpu.memory_space<smem>>
    %c7 = arith.constant 7 : index
    %294 = memref.load %arg10[%c7] : memref<11xf32, #tpu.memory_space<smem>>
    memref.store %276, %arg10[%c7] : memref<11xf32, #tpu.memory_space<smem>>
    %c8 = arith.constant 8 : index
    %295 = memref.load %arg10[%c8] : memref<11xf32, #tpu.memory_space<smem>>
    memref.store %279, %arg10[%c8] : memref<11xf32, #tpu.memory_space<smem>>
    %c9 = arith.constant 9 : index
    %296 = memref.load %arg10[%c9] : memref<11xf32, #tpu.memory_space<smem>>
    memref.store %264, %arg10[%c9] : memref<11xf32, #tpu.memory_space<smem>>
    %c10 = arith.constant 10 : index
    %297 = memref.load %arg10[%c10] : memref<11xf32, #tpu.memory_space<smem>>
    memref.store %286, %arg10[%c10] : memref<11xf32, #tpu.memory_space<smem>>
    return
  }
}

</mosaic_0001>

<llo_original>
// kernel: joint2pose_forward.1
$region0: #{joint2pose_forward.1}
  #allocation0 [shape = 'u32[]', space=smem, size = 0x4, offset = 0x4, fixed_abs, tag = 'smem constant byte address 0x4 - core index']
  #allocation1 [shape = 'u32[144,128]{1,0:T(1,128)}', space=vmem, size = 0x12000, scoped, tag = 'internal scratch']
  #allocation2 [shape = 'f32[1]{0:T(128)S(6)}', space=smem, size = 0x200, scoped, tag = 'scoped memory for joint2pose_forward.1']
  %s0 = inlined_call_operand.vmem [shape: f32[32,128], index: 0, kind: input, shape index: {}]
  %s1 = inlined_call_operand.vmem [shape: f32[32,128], index: 1, kind: input, shape index: {}]
  %s2 = inlined_call_operand.vmem [shape: f32[32,128], index: 2, kind: input, shape index: {}]
  %s3 = inlined_call_operand.vmem [shape: f32[32,128], index: 3, kind: input, shape index: {}]
  %s4 = inlined_call_operand.vmem [shape: f32[16,32], index: 4, kind: input, shape index: {}]
  %s5 = inlined_call_operand.vmem [shape: f32[16,32], index: 5, kind: input, shape index: {}]
  %s6 = inlined_call_operand.vmem [shape: f32[2,8], index: 6, kind: input, shape index: {}]
  %s7 = inlined_call_operand.<no memory space> [shape: f32[1], index: 7, kind: input, shape index: {}]
  %s8 = inlined_call_operand.vmem [shape: f32[32,128], index: 8, kind: output, shape index: {0}]
  %s9 = inlined_call_operand.vmem [shape: f32[32,128], index: 9, kind: output, shape index: {1}]
  %s10 = inlined_call_operand.vmem [shape: f32[11], index: 10, kind: output, shape index: {2}]
  %11 = xla_tuple %s8, %s9, %s10
  %s12 = sld [smem:[#allocation0]]
  $region58: #{joint2pose_forward.1} parent=0
    _
  %s14 = ssub.s32 1, %s12
  %s15 = scalar_select 0, %s14, %s12
  %16 = sst [smem:[#allocation2]] %s7
  $region1: #{joint2pose_forward.1} parent=0
    #allocation3 [shape = 'u8[512]{0}', space=smem, size = 0x200, scoped, tag = 'output window, operand 2, single buffered']
    #allocation4 [shape = 's32[1]{0}', space=sflag, size = 0x4, scoped, tag = 'scoped memory for joint2pose_forward.1']
    %17 = vsyncpa [#allocation4], 0
    // Predicated region
    $region2: #{joint2pose_forward.1} parent=1 // pred_check
      _
    $region3: #{joint2pose_forward.1} parent=1 // pred_check_branch
      %19 = sbr.rel (0) target = $region5
    $region4: #{joint2pose_forward.1} parent=1 // pred_region
      _
    $region5: #{joint2pose_forward.1} parent=1 // pred_fallthru
      _
    // Predicated region
    $region6: #{joint2pose_forward.1} parent=1 // pred_check
      _
    $region7: #{joint2pose_forward.1} parent=1 // pred_check_branch
      %21 = sbr.rel (0) target = $region9
    $region8: #{joint2pose_forward.1} parent=1 // pred_region
      _
    $region9: #{joint2pose_forward.1} parent=1 // pred_fallthru
      _
    // Predicated region
    $region10: #{joint2pose_forward.1} parent=1 // pred_check
      _
    $region11: #{joint2pose_forward.1} parent=1 // pred_check_branch
      %23 = sbr.rel (0) target = $region13
    $region12: #{joint2pose_forward.1} parent=1 // pred_region
      _
    $region13: #{joint2pose_forward.1} parent=1 // pred_fallthru
      _
    // Predicated region
    $region14: #{joint2pose_forward.1} parent=1 // pred_check
      _
    $region15: #{joint2pose_forward.1} parent=1 // pred_check_branch
      %25 = sbr.rel (0) target = $region17
    $region16: #{joint2pose_forward.1} parent=1 // pred_region
      _
    $region17: #{joint2pose_forward.1} parent=1 // pred_fallthru
      _
    // Predicated region
    $region18: #{joint2pose_forward.1} parent=1 // pred_check
      _
    $region19: #{joint2pose_forward.1} parent=1 // pred_check_branch
      %27 = sbr.rel (0) target = $region21
    $region20: #{joint2pose_forward.1} parent=1 // pred_region
      _
    $region21: #{joint2pose_forward.1} parent=1 // pred_fallthru
      _
    // Predicated region
    $region22: #{joint2pose_forward.1} parent=1 // pred_check
      _
    $region23: #{joint2pose_forward.1} parent=1 // pred_check_branch
      %29 = sbr.rel (0) target = $region25
    $region24: #{joint2pose_forward.1} parent=1 // pred_region
      _
    $region25: #{joint2pose_forward.1} parent=1 // pred_fallthru
      _
    // Predicated region
    $region26: #{joint2pose_forward.1} parent=1 // pred_check
      _
    $region27: #{joint2pose_forward.1} parent=1 // pred_check_branch
      %31 = sbr.rel (0) target = $region29
    $region28: #{joint2pose_forward.1} parent=1 // pred_region
      _
    $region29: #{joint2pose_forward.1} parent=1 // pred_fallthru
      _
    // Predicated region
    $region30: #{joint2pose_forward.1} parent=1 // pred_check
      _
    $region31: #{joint2pose_forward.1} parent=1 // pred_check_branch
      %33 = sbr.rel (0) target = $region33
    $region32: #{joint2pose_forward.1} parent=1 // pred_region
      _
    $region33: #{joint2pose_forward.1} parent=1 // pred_fallthru
      _
    %v34 = vld [vmem:[%s0] sm:$0xff]
    %v35 = vld [vmem:[%s0 + $0x8] sm:$0xff]
    %v36 = vld [vmem:[%s0 + $0x10] sm:$0xff]
    %v37 = vld [vmem:[%s0 + $0x18] sm:$0xff]
    %v38 = vld [vmem:[%s1] sm:$0xff]
    %v39 = vld [vmem:[%s1 + $0x8] sm:$0xff]
    %v40 = vld [vmem:[%s1 + $0x10] sm:$0xff]
    %v41 = vld [vmem:[%s1 + $0x18] sm:$0xff]
    %v42 = vld [vmem:[%s2] sm:$0xff]
    %v43 = vld [vmem:[%s2 + $0x8] sm:$0xff]
    %v44 = vld [vmem:[%s2 + $0x10] sm:$0xff]
    %v45 = vld [vmem:[%s2 + $0x18] sm:$0xff]
    %v46 = vld [vmem:[%s3] sm:$0xff]
    %v47 = vld [vmem:[%s3 + $0x8] sm:$0xff]
    %v48 = vld [vmem:[%s3 + $0x10] sm:$0xff]
    %v49 = vld [vmem:[%s3 + $0x18] sm:$0xff]
    %v50 = vlaneseq
    %v51 = vand.u32 %v50, 127
    %vm52 = vcmp.lt.s32.totalorder %v51, 9
    %vm53 = vcmp.ge.s32.totalorder %v51, 9
    %vm54 = vcmp.lt.s32.totalorder %v51, 79
    %vm55 = vmand %vm53, %vm54
    %vm56 = vcmp.ge.s32.totalorder %v51, 79
    %vm57 = vcmp.lt.s32.totalorder %v51, 121
    %vm58 = vmand %vm56, %vm57
    %vm59 = vcmp.lt.s32.totalorder %v51, 70
    %vm60 = vcmp.lt.s32.totalorder %v51, 51
    %vm61 = vmand %vm53, %vm60
    %62 = vrot.lane.b32.xlu0 %v38, 9
    %v63 = vpop.permute.xlu0 %62
    %64 = vrot.lane.b32.xlu0 %v39, 9
    %v65 = vpop.permute.xlu0 %64
    %66 = vrot.lane.b32.xlu0 %v40, 9
    %v67 = vpop.permute.xlu0 %66
    %68 = vrot.lane.b32.xlu0 %v41, 9
    %v69 = vpop.permute.xlu0 %68
    %70 = vrot.lane.b32.xlu0 %v42, 70
    %v71 = vpop.permute.xlu0 %70
    %72 = vrot.lane.b32.xlu0 %v43, 70
    %v73 = vpop.permute.xlu0 %72
    %74 = vrot.lane.b32.xlu0 %v44, 70
    %v75 = vpop.permute.xlu0 %74
    %76 = vrot.lane.b32.xlu0 %v45, 70
    %v77 = vpop.permute.xlu0 %76
    %78 = vrot.lane.b32.xlu0 %v46, 70
    %v79 = vpop.permute.xlu0 %78
    %80 = vrot.lane.b32.xlu0 %v47, 70
    %v81 = vpop.permute.xlu0 %80
    %82 = vrot.lane.b32.xlu0 %v48, 70
    %v83 = vpop.permute.xlu0 %82
    %84 = vrot.lane.b32.xlu0 %v49, 70
    %v85 = vpop.permute.xlu0 %84
    %86 = vrot.lane.b32.xlu0 %v34, 119
    %v87 = vpop.permute.xlu0 %86
    %88 = vrot.lane.b32.xlu0 %v35, 119
    %v89 = vpop.permute.xlu0 %88
    %90 = vrot.lane.b32.xlu0 %v36, 119
    %v91 = vpop.permute.xlu0 %90
    %92 = vrot.lane.b32.xlu0 %v37, 119
    %v93 = vpop.permute.xlu0 %92
    %94 = vrot.lane.b32.xlu0 %v34, 58
    %v95 = vpop.permute.xlu0 %94
    %96 = vrot.lane.b32.xlu0 %v35, 58
    %v97 = vpop.permute.xlu0 %96
    %98 = vrot.lane.b32.xlu0 %v36, 58
    %v99 = vpop.permute.xlu0 %98
    %100 = vrot.lane.b32.xlu0 %v37, 58
    %v101 = vpop.permute.xlu0 %100
    %v102 = vsel %vm52, 1, 0
    %vm103 = vcmp.eq.s32.totalorder %v102, 1
    %v104 = vsel %vm103, %v42, 0.0
    %v105 = vsel %vm103, %v43, 0.0
    %v106 = vsel %vm103, %v44, 0.0
    %v107 = vsel %vm103, %v45, 0.0
    %109 = vset.pattern.permute.xlu0 0
    %110 = vperm.xlu0 %109, %v42
    %v111 = vpop.permute.xlu0 %110
    %114 = vset.pattern.permute.xlu0 0
    %115 = vperm.xlu0 %114, %v43
    %v116 = vpop.permute.xlu0 %115
    %119 = vset.pattern.permute.xlu0 0
    %120 = vperm.xlu0 %119, %v44
    %v121 = vpop.permute.xlu0 %120
    %124 = vset.pattern.permute.xlu0 0
    %125 = vperm.xlu0 %124, %v45
    %v126 = vpop.permute.xlu0 %125
    %v128 = vadd.f32 %v63, %v111
    %v129 = vadd.f32 %v65, %v116
    %v130 = vadd.f32 %v67, %v121
    %v131 = vadd.f32 %v69, %v126
    %v132 = vsel %vm55, 1, 0
    %vm133 = vcmp.eq.s32.totalorder %v132, 1
    %v134 = vsel %vm133, %v128, %v104
    %v135 = vsel %vm133, %v129, %v105
    %v136 = vsel %vm133, %v130, %v106
    %v137 = vsel %vm133, %v131, %v107
    %v138 = vsel %vm58, 1, 0
    %vm139 = vcmp.eq.s32.totalorder %v138, 1
    %v140 = vsel %vm139, %v71, %v134
    %v141 = vsel %vm139, %v73, %v135
    %v142 = vsel %vm139, %v75, %v136
    %v143 = vsel %vm139, %v77, %v137
    %144 = vst [vmem:[%s8] sm:$0xff] %v140
    %145 = vst [vmem:[%s8 + $0x8] sm:$0xff] %v141
    %146 = vst [vmem:[%s8 + $0x10] sm:$0xff] %v142
    %147 = vst [vmem:[%s8 + $0x18] sm:$0xff] %v143
    %v148 = vsel %vm103, %v46, 0.0
    %v149 = vsel %vm103, %v47, 0.0
    %v150 = vsel %vm103, %v48, 0.0
    %v151 = vsel %vm103, %v49, 0.0
    %v152 = vsel %vm133, %v34, %v148
    %v153 = vsel %vm133, %v35, %v149
    %v154 = vsel %vm133, %v36, %v150
    %v155 = vsel %vm133, %v37, %v151
    %v156 = vsel %vm139, %v79, %v152
    %v157 = vsel %vm139, %v81, %v153
    %v158 = vsel %vm139, %v83, %v154
    %v159 = vsel %vm139, %v85, %v155
    %160 = vst [vmem:[%s9] sm:$0xff] %v156
    %161 = vst [vmem:[%s9 + $0x8] sm:$0xff] %v157
    %162 = vst [vmem:[%s9 + $0x10] sm:$0xff] %v158
    %163 = vst [vmem:[%s9 + $0x18] sm:$0xff] %v159
    %165 = vset.pattern.permute.xlu0 0
    %166 = vperm.xlu0 %165, %v34
    %v167 = vpop.permute.xlu0 %166
    %170 = vset.pattern.permute.xlu0 0
    %171 = vperm.xlu0 %170, %v35
    %v172 = vpop.permute.xlu0 %171
    %175 = vset.pattern.permute.xlu0 0
    %176 = vperm.xlu0 %175, %v36
    %v177 = vpop.permute.xlu0 %176
    %180 = vset.pattern.permute.xlu0 0
    %181 = vperm.xlu0 %180, %v37
    %v182 = vpop.permute.xlu0 %181
    %v184 = vsub.f32 %v87, %v167
    %v185 = vsub.f32 %v89, %v172
    %v186 = vsub.f32 %v91, %v177
    %v187 = vsub.f32 %v93, %v182
    %v188 = vsel %vm59, 1, 0
    %vm189 = vcmp.eq.s32.totalorder %v188, 1
    %v190 = vsel %vm189, %v184, 0.0
    %v191 = vsel %vm189, %v185, 0.0
    %v192 = vsel %vm189, %v186, 0.0
    %v193 = vsel %vm189, %v187, 0.0
    %v194 = vsel %vm103, %v34, 0.0
    %v195 = vsel %vm103, %v35, 0.0
    %v196 = vsel %vm103, %v36, 0.0
    %v197 = vsel %vm103, %v37, 0.0
    %v198 = vsel %vm61, 1, 0
    %vm199 = vcmp.eq.s32.totalorder %v198, 1
    %v200 = vsel %vm199, %v95, %v194
    %v201 = vsel %vm199, %v97, %v195
    %v202 = vsel %vm199, %v99, %v196
    %v203 = vsel %vm199, %v101, %v197
    %v204 = vsub.f32 %v46, %v200
    %v205 = vsub.f32 %v47, %v201
    %v206 = vsub.f32 %v48, %v202
    %v207 = vsub.f32 %v49, %v203
    %v208 = vand.u32 2147483647, %v204
    %v209 = vand.u32 2147483647, %v205
    %v210 = vand.u32 2147483647, %v206
    %v211 = vand.u32 2147483647, %v207
    %vm212 = vcmp.lt.f32.partialorder %v208, 1.0
    %vm213 = vcmp.lt.f32.partialorder %v209, 1.0
    %vm214 = vcmp.lt.f32.partialorder %v210, 1.0
    %vm215 = vcmp.lt.f32.partialorder %v211, 1.0
    %v216 = vmul.f32 %v208, 0.5
    %v217 = vmul.f32 %v209, 0.5
    %v218 = vmul.f32 %v210, 0.5
    %v219 = vmul.f32 %v211, 0.5
    %v220 = vmul.f32 %v216, %v208
    %v221 = vmul.f32 %v217, %v209
    %v222 = vmul.f32 %v218, %v210
    %v223 = vmul.f32 %v219, %v211
    %v224 = vsub.f32 %v208, 0.5
    %v225 = vsub.f32 %v209, 0.5
    %v226 = vsub.f32 %v210, 0.5
    %v227 = vsub.f32 %v211, 0.5
    %v228 = vsel %vm212, %v220, %v224
    %v229 = vsel %vm213, %v221, %v225
    %v230 = vsel %vm214, %v222, %v226
    %v231 = vsel %vm215, %v223, %v227
    %v232 = vadd.f32 %v228, %v229
    %v233 = vadd.f32 %v232, %v230
    %v234 = vadd.f32 %v233, %v231
    %v235 = vrot.slane %v234, 4
    %v236 = vadd.f32 %v234, %v235
    %v237 = vrot.slane %v236, 2
    %v238 = vadd.f32 %v236, %v237
    %v239 = vrot.slane %v238, 1
    %v240 = vadd.f32 %v238, %v239
    %vm241 = vcmask 1040384
    %v242 = vsel %vm241, %v240, 0.0
    %243 = vadd.xlane.f32.xlu0 %v242
    %v244 = vpop.xlane.xlu0 %243
    %v245 = vrot.slane %v244, 4
    %v246 = vadd.f32 %v244, %v245
    %v247 = vrot.slane %v246, 2
    %v248 = vadd.f32 %v246, %v247
    %v249 = vrot.slane %v248, 1
    %v250 = vadd.f32 %v248, %v249
    %s251 = vtos %v250
    %v252 = vsub.f32 %v38, %v190
    %v253 = vsub.f32 %v39, %v191
    %v254 = vsub.f32 %v40, %v192
    %v255 = vsub.f32 %v41, %v193
    %v256 = vand.u32 2147483647, %v252
    %v257 = vand.u32 2147483647, %v253
    %v258 = vand.u32 2147483647, %v254
    %v259 = vand.u32 2147483647, %v255
    %vm260 = vcmp.lt.f32.partialorder %v256, 1.0
    %vm261 = vcmp.lt.f32.partialorder %v257, 1.0
    %vm262 = vcmp.lt.f32.partialorder %v258, 1.0
    %vm263 = vcmp.lt.f32.partialorder %v259, 1.0
    %v264 = vmul.f32 %v256, 0.5
    %v265 = vmul.f32 %v257, 0.5
    %v266 = vmul.f32 %v258, 0.5
    %v267 = vmul.f32 %v259, 0.5
    %v268 = vmul.f32 %v264, %v256
    %v269 = vmul.f32 %v265, %v257
    %v270 = vmul.f32 %v266, %v258
    %v271 = vmul.f32 %v267, %v259
    %v272 = vsub.f32 %v256, 0.5
    %v273 = vsub.f32 %v257, 0.5
    %v274 = vsub.f32 %v258, 0.5
    %v275 = vsub.f32 %v259, 0.5
    %v276 = vsel %vm260, %v268, %v272
    %v277 = vsel %vm261, %v269, %v273
    %v278 = vsel %vm262, %v270, %v274
    %v279 = vsel %vm263, %v271, %v275
    %v280 = vadd.f32 %v276, %v277
    %v281 = vadd.f32 %v280, %v278
    %v282 = vadd.f32 %v281, %v279
    %v283 = vrot.slane %v282, 4
    %v284 = vadd.f32 %v282, %v283
    %v285 = vrot.slane %v284, 2
    %v286 = vadd.f32 %v284, %v285
    %v287 = vrot.slane %v286, 1
    %v288 = vadd.f32 %v286, %v287
    %v289 = vsel %vm241, %v288, 0.0
    %290 = vadd.xlane.f32.xlu0 %v289
    %v291 = vpop.xlane.xlu0 %290
    %v292 = vrot.slane %v291, 4
    %v293 = vadd.f32 %v291, %v292
    %v294 = vrot.slane %v293, 2
    %v295 = vadd.f32 %v293, %v294
    %v296 = vrot.slane %v295, 1
    %v297 = vadd.f32 %v295, %v296
    %s298 = vtos %v297
    %v299 = vsub.f32 %v42, %v200
    %v300 = vsub.f32 %v43, %v201
    %v301 = vsub.f32 %v44, %v202
    %v302 = vsub.f32 %v45, %v203
    %v303 = vand.u32 2147483647, %v299
    %v304 = vand.u32 2147483647, %v300
    %v305 = vand.u32 2147483647, %v301
    %v306 = vand.u32 2147483647, %v302
    %vm307 = vcmp.lt.f32.partialorder %v303, 1.0
    %vm308 = vcmp.lt.f32.partialorder %v304, 1.0
    %vm309 = vcmp.lt.f32.partialorder %v305, 1.0
    %vm310 = vcmp.lt.f32.partialorder %v306, 1.0
    %v311 = vmul.f32 %v303, 0.5
    %v312 = vmul.f32 %v304, 0.5
    %v313 = vmul.f32 %v305, 0.5
    %v314 = vmul.f32 %v306, 0.5
    %v315 = vmul.f32 %v311, %v303
    %v316 = vmul.f32 %v312, %v304
    %v317 = vmul.f32 %v313, %v305
    %v318 = vmul.f32 %v314, %v306
    %v319 = vsub.f32 %v303, 0.5
    %v320 = vsub.f32 %v304, 0.5
    %v321 = vsub.f32 %v305, 0.5
    %v322 = vsub.f32 %v306, 0.5
    %v323 = vsel %vm307, %v315, %v319
    %v324 = vsel %vm308, %v316, %v320
    %v325 = vsel %vm309, %v317, %v321
    %v326 = vsel %vm310, %v318, %v322
    %v327 = vadd.f32 %v323, %v324
    %v328 = vadd.f32 %v327, %v325
    %v329 = vadd.f32 %v328, %v326
    %v330 = vrot.slane %v329, 4
    %v331 = vadd.f32 %v329, %v330
    %v332 = vrot.slane %v331, 2
    %v333 = vadd.f32 %v331, %v332
    %v334 = vrot.slane %v333, 1
    %v335 = vadd.f32 %v333, %v334
    %v336 = vsel %vm241, %v335, 0.0
    %337 = vadd.xlane.f32.xlu0 %v336
    %v338 = vpop.xlane.xlu0 %337
    %v339 = vrot.slane %v338, 4
    %v340 = vadd.f32 %v338, %v339
    %v341 = vrot.slane %v340, 2
    %v342 = vadd.f32 %v340, %v341
    %v343 = vrot.slane %v342, 1
    %v344 = vadd.f32 %v342, %v343
    %s345 = vtos %v344
    %v346 = vsub.f32 %v140, %v34
    %v347 = vsub.f32 %v141, %v35
    %v348 = vsub.f32 %v142, %v36
    %v349 = vsub.f32 %v143, %v37
    %v350 = vand.u32 2147483647, %v346
    %v351 = vand.u32 2147483647, %v347
    %v352 = vand.u32 2147483647, %v348
    %v353 = vand.u32 2147483647, %v349
    %v354 = vadd.f32 %v350, %v351
    %v355 = vadd.f32 %v354, %v352
    %v356 = vadd.f32 %v355, %v353
    %v357 = vrot.slane %v356, 4
    %v358 = vadd.f32 %v356, %v357
    %v359 = vrot.slane %v358, 2
    %v360 = vadd.f32 %v358, %v359
    %v361 = vrot.slane %v360, 1
    %v362 = vadd.f32 %v360, %v361
    %v363 = vsel %vm241, %v362, 0.0
    %364 = vadd.xlane.f32.xlu0 %v363
    %v365 = vpop.xlane.xlu0 %364
    %v366 = vrot.slane %v365, 4
    %v367 = vadd.f32 %v365, %v366
    %v368 = vrot.slane %v367, 2
    %v369 = vadd.f32 %v367, %v368
    %v370 = vrot.slane %v369, 1
    %v371 = vadd.f32 %v369, %v370
    %s372 = vtos %v371
    %v373 = vld [vmem:[%s4] sm:$0xff]
    %v374 = vld [vmem:[%s4 + $0x8] sm:$0xff]
    %v375 = vld [vmem:[%s5] sm:$0xff]
    %v376 = vld [vmem:[%s5 + $0x8] sm:$0xff]
    %v377 = vmul.f32 %v373, %v375
    %v378 = vmul.f32 %v374, %v376
    %vm379 = vcmask 261120
    %v380 = vsel %vm379, %v377, 0.0
    %381 = vadd.xlane.f32.xlu0 %v380
    %v382 = vpop.xlane.xlu0 %381
    %v383 = vsel %vm379, %v378, 0.0
    %384 = vadd.xlane.f32.xlu0 %v383
    %v385 = vpop.xlane.xlu0 %384
    %v386 = vmul.f32 %v373, %v373
    %v387 = vmul.f32 %v374, %v374
    %v388 = vsel %vm379, %v386, 0.0
    %389 = vadd.xlane.f32.xlu0 %v388
    %v390 = vpop.xlane.xlu0 %389
    %v391 = vsel %vm379, %v387, 0.0
    %392 = vadd.xlane.f32.xlu0 %v391
    %v393 = vpop.xlane.xlu0 %392
    %v394 = vmul.f32 %v375, %v375
    %v395 = vmul.f32 %v376, %v376
    %v396 = vsel %vm379, %v394, 0.0
    %397 = vadd.xlane.f32.xlu0 %v396
    %v398 = vpop.xlane.xlu0 %397
    %v399 = vsel %vm379, %v395, 0.0
    %400 = vadd.xlane.f32.xlu0 %v399
    %v401 = vpop.xlane.xlu0 %400
    %v402 = vmax.f32 %v390, 1e-16
    %v403 = vmax.f32 %v393, 1e-16
    %v404 = vrsqrt.pop %v402
    %v405 = vrsqrt.pop %v403
    %v406 = vmul.f32 %v382, %v404
    %v407 = vmul.f32 %v385, %v405
    %v408 = vmax.f32 %v398, 1e-16
    %v409 = vmax.f32 %v401, 1e-16
    %v410 = vrsqrt.pop %v408
    %v411 = vrsqrt.pop %v409
    %v412 = vmul.f32 %v406, %v410
    %v413 = vmul.f32 %v407, %v411
    %v414 = vsub.f32 1.0, %v412
    %v415 = vsub.f32 1.0, %v413
    %vm416 = vcmask 7168
    %v417 = vsel %vm416, %v414, 0.0
    %v418 = vsel %vm416, %v415, 0.0
    %v419 = vadd.f32 %v417, %v418
    %420 = vadd.xlane.f32.xlu0 %v419
    %v421 = vpop.xlane.xlu0 %420
    %v422 = vrot.slane %v421, 4
    %v423 = vadd.f32 %v421, %v422
    %v424 = vrot.slane %v423, 2
    %v425 = vadd.f32 %v423, %v424
    %v426 = vrot.slane %v425, 1
    %v427 = vadd.f32 %v425, %v426
    %s428 = vtos %v427
    %v429 = vrcp.pop 16.0
    %s430 = vtos %v429
    %s431 = smul.f32 %s428, %s430
    %432 = vrot.lane.b32.xlu0 %v140, 1
    %v433 = vpop.permute.xlu0 %432
    %434 = vrot.lane.b32.xlu0 %v141, 1
    %v435 = vpop.permute.xlu0 %434
    %v436 = vsub.f32 %v140, %v433
    %v437 = vsub.f32 %v141, %v435
    %438 = vrot.lane.b32.xlu0 %v142, 1
    %v439 = vpop.permute.xlu0 %438
    %440 = vrot.lane.b32.xlu0 %v143, 1
    %v441 = vpop.permute.xlu0 %440
    %v442 = vsub.f32 %v142, %v439
    %v443 = vsub.f32 %v143, %v441
    %444 = vrot.lane.b32.xlu0 %v34, 1
    %v445 = vpop.permute.xlu0 %444
    %446 = vrot.lane.b32.xlu0 %v35, 1
    %v447 = vpop.permute.xlu0 %446
    %v448 = vsub.f32 %v34, %v445
    %v449 = vsub.f32 %v35, %v447
    %450 = vrot.lane.b32.xlu0 %v36, 1
    %v451 = vpop.permute.xlu0 %450
    %452 = vrot.lane.b32.xlu0 %v37, 1
    %v453 = vpop.permute.xlu0 %452
    %v454 = vsub.f32 %v36, %v451
    %v455 = vsub.f32 %v37, %v453
    %v456 = vmul.f32 %v436, %v448
    %v457 = vmul.f32 %v437, %v449
    %v458 = vmul.f32 %v442, %v454
    %v459 = vmul.f32 %v443, %v455
    %v460 = vadd.f32 %v456, %v458
    %v461 = vadd.f32 %v457, %v459
    %v462 = vmul.f32 %v436, %v436
    %v463 = vmul.f32 %v437, %v437
    %v464 = vmul.f32 %v442, %v442
    %v465 = vmul.f32 %v443, %v443
    %v466 = vadd.f32 %v462, %v464
    %v467 = vadd.f32 %v463, %v465
    %v468 = vmul.f32 %v448, %v448
    %v469 = vmul.f32 %v449, %v449
    %v470 = vmul.f32 %v454, %v454
    %v471 = vmul.f32 %v455, %v455
    %v472 = vadd.f32 %v468, %v470
    %v473 = vadd.f32 %v469, %v471
    %v474 = vmax.f32 %v466, 1e-16
    %v475 = vmax.f32 %v467, 1e-16
    %v476 = vrsqrt.pop %v474
    %v477 = vrsqrt.pop %v475
    %v478 = vmul.f32 %v460, %v476
    %v479 = vmul.f32 %v461, %v477
    %v480 = vmax.f32 %v472, 1e-16
    %v481 = vmax.f32 %v473, 1e-16
    %v482 = vrsqrt.pop %v480
    %v483 = vrsqrt.pop %v481
    %v484 = vmul.f32 %v478, %v482
    %v485 = vmul.f32 %v479, %v483
    %v486 = vmul.f32 %v484, %v484
    %v487 = vmul.f32 %v485, %v485
    %v488 = vmul.f32 %v486, %v486
    %v489 = vmul.f32 %v487, %v487
    %v490 = vmul.f32 %v488, %v488
    %v491 = vmul.f32 %v489, %v489
    %v492 = vmul.f32 %v490, %v490
    %v493 = vmul.f32 %v491, %v491
    %v494 = vmul.f32 %v492, %v492
    %v495 = vmul.f32 %v493, %v493
    %v496 = vmul.f32 %v494, %v494
    %v497 = vmul.f32 %v495, %v495
    %v498 = vmul.f32 %v496, %v494
    %v499 = vmul.f32 %v497, %v495
    %v500 = vmul.f32 %v498, %v488
    %v501 = vmul.f32 %v499, %v489
    %v502 = vadd.f32 %v500, %v501
    %v503 = vrot.slane %v502, 4
    %v504 = vadd.f32 %v502, %v503
    %v505 = vrot.slane %v504, 2
    %v506 = vadd.f32 %v504, %v505
    %v507 = vrot.slane %v506, 1
    %v508 = vadd.f32 %v506, %v507
    %vm509 = vcmp.eq.s32.totalorder %v51, 2
    %v510 = vsel %vm509, %v508, 0.0
    %v511 = vsel %vm241, %v510, 0.0
    %512 = vadd.xlane.f32.xlu0 %v511
    %v513 = vpop.xlane.xlu0 %512
    %v514 = vrot.slane %v513, 4
    %v515 = vadd.f32 %v513, %v514
    %v516 = vrot.slane %v515, 2
    %v517 = vadd.f32 %v515, %v516
    %v518 = vrot.slane %v517, 1
    %v519 = vadd.f32 %v517, %v518
    %s520 = vtos %v519
    %s521 = smul.f32 %s520, 0.0625
    %vm522 = vcmp.eq.s32.totalorder %v51, 3
    %v523 = vsel %vm522, %v508, 0.0
    %v524 = vsel %vm241, %v523, 0.0
    %525 = vadd.xlane.f32.xlu0 %v524
    %v526 = vpop.xlane.xlu0 %525
    %v527 = vrot.slane %v526, 4
    %v528 = vadd.f32 %v526, %v527
    %v529 = vrot.slane %v528, 2
    %v530 = vadd.f32 %v528, %v529
    %v531 = vrot.slane %v530, 1
    %v532 = vadd.f32 %v530, %v531
    %s533 = vtos %v532
    %s534 = smul.f32 %s533, 0.0625
    %vm535 = vcmp.eq.s32.totalorder %v51, 5
    %v536 = vsel %vm535, %v508, 0.0
    %v537 = vsel %vm241, %v536, 0.0
    %538 = vadd.xlane.f32.xlu0 %v537
    %v539 = vpop.xlane.xlu0 %538
    %v540 = vrot.slane %v539, 4
    %v541 = vadd.f32 %v539, %v540
    %v542 = vrot.slane %v541, 2
    %v543 = vadd.f32 %v541, %v542
    %v544 = vrot.slane %v543, 1
    %v545 = vadd.f32 %v543, %v544
    %s546 = vtos %v545
    %s547 = smul.f32 %s546, 0.0625
    %vm548 = vcmp.eq.s32.totalorder %v51, 6
    %v549 = vsel %vm548, %v508, 0.0
    %v550 = vsel %vm241, %v549, 0.0
    %551 = vadd.xlane.f32.xlu0 %v550
    %v552 = vpop.xlane.xlu0 %551
    %v553 = vrot.slane %v552, 4
    %v554 = vadd.f32 %v552, %v553
    %v555 = vrot.slane %v554, 2
    %v556 = vadd.f32 %v554, %v555
    %v557 = vrot.slane %v556, 1
    %v558 = vadd.f32 %v556, %v557
    %s559 = vtos %v558
    %s560 = smul.f32 %s559, 0.0625
    %v561 = vld [vmem:[%s6] sm:$0x3]
    %vm562 = vcmask 58368
    %v563 = vsel %vm562, %v561, 0.0
    %v564 = vrot.slane %v563, 4
    %v565 = vadd.f32 %v563, %v564
    %v566 = vrot.slane %v565, 2
    %v567 = vadd.f32 %v565, %v566
    %v568 = vrot.slane %v567, 1
    %v569 = vadd.f32 %v567, %v568
    %v570 = vrcp.pop 2.0
    %v571 = vmul.f32 %v569, %v570
    %v572 = vsub.f32 %v561, %v571
    %v573 = vmul.f32 %v572, %v572
    %v574 = vsel %vm562, %v573, 0.0
    %v575 = vrot.slane %v574, 4
    %v576 = vadd.f32 %v574, %v575
    %v577 = vrot.slane %v576, 2
    %v578 = vadd.f32 %v576, %v577
    %v579 = vrot.slane %v578, 1
    %v580 = vadd.f32 %v578, %v579
    %vm581 = vcmp.gt.f32.partialorder %v580, 0.0
    %v582 = vsel %vm581, %v580, 1.0
    %v583 = vlog2.pop %v582
    %v584 = vmul.f32 %v583, 0.6931472
    %v585 = vsub.f32 0.0, %v584
    %v586 = vmul.f32 %v571, %v571
    %v587 = vadd.f32 %v585, %v586
    %v588 = vadd.f32 %v587, %v580
    %v589 = vsub.f32 %v588, 1.0
    %vm590 = vcmask 57344
    %v591 = vsel %vm590, %v589, 0.0
    %592 = vadd.xlane.f32.xlu0 %v591
    %v593 = vpop.xlane.xlu0 %592
    %v594 = vrot.slane %v593, 4
    %v595 = vadd.f32 %v593, %v594
    %v596 = vrot.slane %v595, 2
    %v597 = vadd.f32 %v595, %v596
    %v598 = vrot.slane %v597, 1
    %v599 = vadd.f32 %v597, %v598
    %s600 = vtos %v599
    %v601 = vrcp.pop 8.0
    %s602 = vtos %v601
    %s603 = smul.f32 %s600, %s602
    %s604 = smul.f32 %s603, 0.5
    %v605 = vsel %vm581, 1.0, 0.0
    %vm606 = vcmask 64512
    %v607 = vsel %vm606, %v605, inf
    %608 = vmin.xlane.f32.xlu0 %v607
    %v609 = vpop.xlane.xlu0 %608
    %s610 = vtos %v609
    %s611 = smul.f32 %s604, %s610
    %s612 = sld [smem:[#allocation2]]
    %s613 = smul.f32 %s251, 0.012254902
    %s614 = smul.f32 %s372, 0.00025826445
    %s615 = smul.f32 %s298, 20.0
    %s616 = smul.f32 %s345, 20.0
    %v617 = vrcp.pop 2240.0
    %s618 = vtos %v617
    %s619 = smul.f32 %s615, %s618
    %v620 = vrcp.pop 1632.0
    %s621 = vtos %v620
    %s622 = smul.f32 %s616, %s621
    %s623 = sadd.f32 %s615, %s616
    %v624 = vrcp.pop 3872.0
    %s625 = vtos %v624
    %s626 = smul.f32 %s623, %s625
    %s627 = ssub.f32 1.0, %s560
    %s628 = ssub.f32 1.0, %s534
    %s629 = sadd.f32 %s627, %s628
    %s630 = ssub.f32 1.0, %s547
    %s631 = ssub.f32 1.0, %s521
    %s632 = sadd.f32 %s630, %s631
    %s633 = sadd.f32 %s614, %s626
    %s634 = sadd.f32 %s633, %s629
    %s635 = sadd.f32 %s634, %s632
    %s636 = sadd.f32 %s635, %s431
    %s637 = sadd.f32 %s636, %s613
    %s638 = sadd.f32 %s637, %s612
    %s639 = sadd.f32 %s638, %s611
    %s640 = scalar_lea.smem [#allocation3], 0
    %641 = sst [smem:[%s640]] %s612
    %s642 = scalar_lea.smem [#allocation3], 1
    %643 = sst [smem:[%s642]] %s431
    %s644 = scalar_lea.smem [#allocation3], 2
    %645 = sst [smem:[%s644]] %s613
    %s646 = scalar_lea.smem [#allocation3], 3
    %647 = sst [smem:[%s646]] %s614
    %s648 = scalar_lea.smem [#allocation3], 4
    %649 = sst [smem:[%s648]] %s619
    %s650 = scalar_lea.smem [#allocation3], 5
    %651 = sst [smem:[%s650]] %s622
    %s652 = scalar_lea.smem [#allocation3], 6
    %653 = sst [smem:[%s652]] %s626
    %s654 = scalar_lea.smem [#allocation3], 7
    %655 = sst [smem:[%s654]] %s629
    %s656 = scalar_lea.smem [#allocation3], 8
    %657 = sst [smem:[%s656]] %s632
    %s658 = scalar_lea.smem [#allocation3], 9
    %659 = sst [smem:[%s658]] %s611
    %s660 = scalar_lea.smem [#allocation3], 10
    %661 = sst [smem:[%s660]] %s639
    // Predicated region
    $region34: #{joint2pose_forward.1} parent=1 // pred_check
      _
    $region35: #{joint2pose_forward.1} parent=1 // pred_check_branch
      %663 = sbr.rel (0) target = $region37
    $region36: #{joint2pose_forward.1} parent=1 // pred_region
      _
    $region37: #{joint2pose_forward.1} parent=1 // pred_fallthru
      _
    // Predicated region
    $region38: #{joint2pose_forward.1} parent=1 // pred_check
      _
    $region39: #{joint2pose_forward.1} parent=1 // pred_check_branch
      %665 = sbr.rel (0) target = $region41
    $region40: #{joint2pose_forward.1} parent=1 // pred_region
      _
    $region41: #{joint2pose_forward.1} parent=1 // pred_fallthru
      _
    // Predicated region
    $region42: #{joint2pose_forward.1} parent=1 // pred_check
      _
    $region43: #{joint2pose_forward.1} parent=1 // pred_check_branch
      %667 = sbr.rel (0) target = $region45
    $region44: #{joint2pose_forward.1} parent=1 // pred_region
      %s669 = ssub.s32 16, 16
      %670 = vsyncadd [#allocation4], %s669
      %s672 = sshll.u32 %s10, 4
      %s673 = int_to_ptr.vmem [resolvable:$true] %s672
      %675 = dma.smem_to_vmem [#allocation3], 16, %s673, [#allocation4]
    $region45: #{joint2pose_forward.1} parent=1 // pred_fallthru
      _
    // Predicated region
    $region46: #{joint2pose_forward.1} parent=1 // pred_check
      _
    $region47: #{joint2pose_forward.1} parent=1 // pred_check_branch
      %677 = sbr.rel (0) target = $region49
    $region48: #{joint2pose_forward.1} parent=1 // pred_region
      _
    $region49: #{joint2pose_forward.1} parent=1 // pred_fallthru
      _
    // Predicated region
    $region50: #{joint2pose_forward.1} parent=1 // pred_check
      _
    $region51: #{joint2pose_forward.1} parent=1 // pred_check_branch
      %679 = sbr.rel (0) target = $region53
    $region52: #{joint2pose_forward.1} parent=1 // pred_region
      _
    $region53: #{joint2pose_forward.1} parent=1 // pred_fallthru
      _
    // Predicated region
    $region54: #{joint2pose_forward.1} parent=1 // pred_check
      _
    $region55: #{joint2pose_forward.1} parent=1 // pred_check_branch
      %681 = sbr.rel (0) target = $region57
    $region56: #{joint2pose_forward.1} parent=1 // pred_region
      %682 = dma.done [#allocation4], 16
    $region57: #{joint2pose_forward.1} parent=1 // pred_fallthru
      _
    %683 = sfence
    %684 = vsyncpa [#allocation4], 1

</llo_original>
